<compile_context>
chip_gen: v5e
topology: v5e:2x2
jax: 0.10.0
libtpu: 0.0.40
codegen_flags: <defaults>
</compile_context>

<pallas_src>
import jax
import jax.numpy as jnp
from jax import lax
from jax.experimental import pallas as pl
from jax.experimental.pallas import tpu as pltpu


def cpc_forward_kernel(x_ref, pad_ref, wc_ref, gamma_ref, beta_ref,
                       wl_ref, bl_ref, perm_ref,
                       out_ref, loss_ref, z_sc, fperm_sc):
    B, Tm1 = pad_ref.shape
    T = Tm1 + 1
    LS = wl_ref.shape[1]
    Tpad = out_ref.shape[-1]

    # --- enc Conv1d(I_DIM, LS, k=1, bias=False): one (M=B*T, Cin)x(Cin, LS) MXU matmul.
    h = jnp.dot(x_ref[...], wc_ref[...], preferred_element_type=jnp.float32)   # (M, LS)

    # --- BatchNorm1d(LS), training-mode batch stats over M, folded into one affine.
    m1 = jnp.mean(h, axis=0, keepdims=True)
    m2 = jnp.mean(h * h, axis=0, keepdims=True)
    var = jnp.maximum(m2 - m1 * m1, 0.0)                       # biased variance
    scale = gamma_ref[...] * lax.rsqrt(var + 1e-5)
    shift = beta_ref[...] - m1 * scale
    hn = h * scale + shift
    hn = jnp.maximum(hn, 0.01 * hn)            # LeakyReLU(0.01); f32 (v5e-safe)

    # --- Linear(LS, LS)
    z2 = jnp.dot(hn.astype(jnp.bfloat16), wl_ref[...],
                 preferred_element_type=jnp.float32) + bl_ref[...]             # (M, LS)
    z3 = z2.reshape(B, T, LS)
    z_sc[...] = z3                             # VMEM copy so the gather loop can index it

    # --- positive pair: one static time-roll (slices+concat) instead of two
    #     off-by-one full-tensor materializations; slice only the small (B, T) results.
    znext = jnp.roll(z3, shift=-1, axis=1)     # znext[:, p] = z3[:, p+1] (wrap is discarded)
    pos_dot = jnp.sum(z3 * znext, axis=-1)[:, :Tm1]            # (B, T-1)
    z2sum = jnp.sum(z3 * z3, axis=-1)                          # (B, T) squared norms
    f2 = z2sum[:, :Tm1]
    n2 = z2sum[:, 1:]

    # --- negative sample z[:, :-1][:, perm]: exact f32 gather.  perm lives in SMEM;
    #     each step copies one time-row (B, 1, LS): O(T*LS) work, no (T-1)^2 one-hot.
    def gather_body(p, carry):
        src = perm_ref[p]
        fperm_sc[:, pl.ds(p, 1), :] = z_sc[:, pl.ds(src, 1), :]
        return carry
    lax.fori_loop(0, Tm1, gather_body, 0)

    f = z3[:, :Tm1, :]                          # aligned-start slice
    fperm = fperm_sc[...]                       # (B, T-1, LS), exact f32 rows
    neg_dot = jnp.sum(f * fperm, axis=-1)
    neg2 = jnp.sum(fperm * fperm, axis=-1)

    # --- cosine similarity with F.cosine_similarity's per-norm clamp (eps=1e-8):
    #     a.b * rsqrt(max(|a|^2, eps^2) * max(|b|^2, eps^2))   (EUP rsqrt, no divide)
    eps2 = 1e-16
    pos_pred = pos_dot * lax.rsqrt(jnp.maximum(f2, eps2) * jnp.maximum(n2, eps2))
    neg_pred = neg_dot * lax.rsqrt(jnp.maximum(f2, eps2) * jnp.maximum(neg2, eps2))

    # --- 2-way log_softmax with a single exp + single log.
    mx = jnp.maximum(pos_pred, neg_pred)
    lse = mx + jnp.log(1.0 + jnp.exp(-jnp.abs(pos_pred - neg_pred)))
    lp_pos = pos_pred - lse
    lp_neg = neg_pred - lse
    loss = -lp_pos * (1.0 - pad_ref[...])

    # --- lane-dense writeback: T-1 padded to a multiple of 128 -> unmasked stores.
    padw = Tpad - Tm1
    if padw:
        zp = jnp.zeros((B, padw), jnp.float32)
        lp_pos = jnp.concatenate([lp_pos, zp], axis=1)
        lp_neg = jnp.concatenate([lp_neg, zp], axis=1)
        loss = jnp.concatenate([loss, zp], axis=1)
    out_ref[...] = jnp.stack([lp_pos, lp_neg], axis=0)         # (2, B, Tpad)
    loss_ref[...] = loss                                       # (B, Tpad)


def _padded_bytes(shape, dtype):
    """VMEM footprint with (sublane, 128)-tile padding of the last two dims."""
    it = jnp.dtype(dtype).itemsize
    sub = 8 * (4 // it) if it < 4 else 8       # f32: 8, bf16: 16 sublanes per tile
    if len(shape) == 1:
        lead, r, c = 1, 1, shape[0]
    else:
        *ld, r, c = shape
        lead = 1
        for d in ld:
            lead *= d
    return lead * (-(-r // sub) * sub) * (-(-c // 128) * 128) * it


def cpc_segmenter_forward(logits, padding_mask, params, perm_idx):
    """logits: (B, T, in_dim) f32; padding_mask: (B, T) bool; perm_idx: (T-1,) int."""
    B, T, Cin = logits.shape
    Tm1 = T - 1
    LS = params['w_lin'].shape[1]
    M = B * T
    Tpad = ((Tm1 + 127) // 128) * 128          # lane-dense output width

    # Wrapper-side layout plumbing (cheap XLA work).
    x2 = logits.reshape(M, Cin).astype(jnp.bfloat16)      # largest input kept bf16
    pad_f = padding_mask[:, :Tm1].astype(jnp.float32)     # mask at position t (torch ref)
    perm = perm_idx.astype(jnp.int32).reshape(Tm1)        # O(T) indices -> SMEM
    wc = params['w_conv'].astype(jnp.bfloat16)
    wl = params['w_lin'].astype(jnp.bfloat16)

    vmem = pl.BlockSpec(memory_space=pltpu.MemorySpace.VMEM)
    smem = pl.BlockSpec(memory_space=pltpu.MemorySpace.SMEM)

    # Advisory cost hint.
    flops = 2 * M * Cin * LS + 2 * M * LS * LS + 14 * M * LS + 30 * B * Tm1
    transcendentals = 4 * B * Tm1 + 2 * LS
    bytes_accessed = (x2.size * 2 + wc.size * 2 + wl.size * 2
                      + (pad_f.size + 3 * LS) * 4 + perm.size * 4
                      + 3 * B * Tpad * 4)
    cost = pl.CostEstimate(flops=int(flops), transcendentals=int(transcendentals),
                           bytes_accessed=int(bytes_accessed))

    # VMEM estimate with tile padding (LS=16 / Cin=32 minor dims pad to 128 lanes).
    vmem_est = (
        _padded_bytes((M, Cin), jnp.bfloat16)                       # x
        + 4 * _padded_bytes((M, LS), jnp.float32)                   # h / hn / z2 (+slack)
        + 3 * _padded_bytes((B, T, LS), jnp.float32)                # z3, z_sc, roll copy
        + 2 * _padded_bytes((B, Tm1, LS), jnp.float32)              # fperm_sc, f slice
        + _padded_bytes((2, B, Tpad), jnp.float32)
        + 10 * _padded_bytes((B, Tpad), jnp.float32)                # small score temps
        + 2 * _padded_bytes((LS, LS), jnp.bfloat16)
    )
    try:  # leave headroom: never request the full physical VMEM (64 MiB on v7x)
        vmem_cap = int(getattr(pltpu.get_tpu_info(), "vmem_capacity_bytes", 64 * 2**20))
    except Exception:
        vmem_cap = 64 * 2**20
    vmem_limit = int(min(3 * vmem_cap // 4, max(32 * 2**20, 2 * vmem_est)))

    out2, loss_p = pl.pallas_call(
        cpc_forward_kernel,
        out_shape=(
            jax.ShapeDtypeStruct((2, B, Tpad), jnp.float32),   # [pos|neg] log-probs
            jax.ShapeDtypeStruct((B, Tpad), jnp.float32),      # loss
        ),
        in_specs=[vmem] * 7 + [smem],
        out_specs=(vmem, vmem),
        scratch_shapes=[pltpu.VMEM((B, T, LS), jnp.float32),       # z (gather source)
                        pltpu.VMEM((B, Tm1, LS), jnp.float32)],    # gathered negatives
        compiler_params=pltpu.CompilerParams(vmem_limit_bytes=vmem_limit),
        cost_estimate=cost,
    )(x2, pad_f, wc, params['gamma'], params['beta'], wl, params['b_lin'], perm)

    out = jnp.moveaxis(out2[:, :, :Tm1], 0, -1)   # (B, T-1, 2) = torch.stack(preds, dim=-1)
    loss = loss_p[:, :Tm1]
    return out, loss


def init_params(key, in_dim, latent_dim):
    k1, k2, k3 = jax.random.split(key, 3)
    # Conv1d weight is (LS, I_DIM, 1) in torch; stored pre-transposed as (I_DIM, LS).
    w_conv = jax.random.normal(k1, (in_dim, latent_dim), jnp.float32) * (1.0 / in_dim ** 0.5)
    gamma = jnp.ones((1, latent_dim), jnp.float32)
    beta = jnp.zeros((1, latent_dim), jnp.float32)
    w_lin = jax.random.normal(k2, (latent_dim, latent_dim), jnp.float32) * (1.0 / latent_dim ** 0.5)
    b_lin = jax.random.normal(k3, (1, latent_dim), jnp.float32) * 0.01
    return dict(w_conv=w_conv, gamma=gamma, beta=beta, w_lin=w_lin, b_lin=b_lin)


def ref_forward(logits, padding_mask, params, perm_idx):
    """Pure-JAX reference (torch semantics, training-mode BN, one negative)."""
    B, T, _ = logits.shape
    x = logits.astype(jnp.bfloat16).astype(jnp.float32)
    wc = params['w_conv'].astype(jnp.bfloat16).astype(jnp.float32)
    wl = params['w_lin'].astype(jnp.bfloat16).astype(jnp.float32)
    h = jnp.einsum('btc,cl->btl', x, wc)
    hm = h.reshape(-1, h.shape[-1])
    mean = hm.mean(0)
    var = ((hm - mean) ** 2).mean(0)
    hn = (h - mean) * params['gamma'][0] / jnp.sqrt(var + 1e-5) + params['beta'][0]
    hn = jnp.where(hn >= 0, hn, 0.01 * hn)
    z = jnp.einsum('btl,lk->btk',
                   hn.astype(jnp.bfloat16).astype(jnp.float32), wl) + params['b_lin'][0]

    def cos(a, b, eps=1e-8):
        na = jnp.maximum(jnp.sqrt(jnp.sum(a * a, -1)), eps)
        nb = jnp.maximum(jnp.sqrt(jnp.sum(b * b, -1)), eps)
        return jnp.sum(a * b, -1) / (na * nb)

    f = z[:, :-1]
    pos = cos(f, z[:, 1:])
    neg = cos(f, f[:, perm_idx])
    out = jax.nn.log_softmax(jnp.stack([pos, neg], -1), axis=-1)
    loss = -out[..., 0] * (1.0 - padding_mask[:, :T - 1].astype(jnp.float32))
    return out, loss


if __name__ == "__main__":
    # SegmentationConfig: in_dim=32, latent_dim=16, n_negatives=1, batch_shuffle=False
    B, T, IN_DIM, LATENT = 2, 8, 32, 16

    key = jax.random.PRNGKey(0)
    k_x, k_p, k_perm = jax.random.split(key, 3)

    logits = jax.random.normal(k_x, (B, T, IN_DIM), jnp.float32)

    # padding mask: sequence lengths [8, 6]
    lengths = jnp.array([8, 6], jnp.int32)
    padding_mask = jnp.arange(T)[None, :] >= lengths[:, None]    # (B, T) bool

    params = init_params(k_p, IN_DIM, LATENT)

    # torch.randperm(T-1) equivalent (n_negatives=1, batch_shuffle=False)
    perm = jax.random.permutation(k_perm, T - 1)                 # (T-1,) indices

    out, loss = cpc_segmenter_forward(logits, padding_mask, params, perm)
    jax.block_until_ready((out, loss))

    assert out.shape == (B, T - 1, 2)       # (pos, n_negatives=1)
    assert loss.shape == (B, T - 1)
    # log_softmax sanity: probabilities over the 2-way axis sum to 1
    assert jnp.allclose(jnp.exp(out).sum(-1), 1.0, atol=1e-3)

    # correctness vs pure-JAX reference (matmul inputs rounded to bf16 in both paths)
    ref_out, ref_loss = ref_forward(logits, padding_mask, params, perm)
    assert jnp.allclose(out, ref_out, atol=2e-3, rtol=2e-3)
    assert jnp.allclose(loss, ref_loss, atol=2e-3, rtol=2e-3)

    print("KERNEL_OK")
</pallas_src>

<mosaic_0001>
module attributes {stable_mosaic.version = 11 : i64} {
  func.func @cpc_forward_kernel(%arg0: memref<16x32xbf16, #tpu.memory_space<vmem>>, %arg1: memref<2x7xf32, #tpu.memory_space<vmem>>, %arg2: memref<32x16xbf16, #tpu.memory_space<vmem>>, %arg3: memref<1x16xf32, #tpu.memory_space<vmem>>, %arg4: memref<1x16xf32, #tpu.memory_space<vmem>>, %arg5: memref<16x16xbf16, #tpu.memory_space<vmem>>, %arg6: memref<1x16xf32, #tpu.memory_space<vmem>>, %arg7: memref<7xi32, #tpu.memory_space<smem>>, %arg8: memref<2x2x128xf32, #tpu.memory_space<vmem>>, %arg9: memref<2x128xf32, #tpu.memory_space<vmem>>, %arg10: memref<2x8x16xf32, #tpu.memory_space<vmem>>, %arg11: memref<2x7x16xf32, #tpu.memory_space<vmem>>) attributes {dimension_semantics = [], scalar_prefetch = 0 : i64, scratch_operands = 2 : i64, tpu.core_type = #tpu.core_type<tc>} {
    %c0 = arith.constant 0 : index
    %c0_0 = arith.constant 0 : index
    %0 = vector.load %arg0[%c0, %c0_0] : memref<16x32xbf16, #tpu.memory_space<vmem>>, vector<16x32xbf16>
    %c0_1 = arith.constant 0 : index
    %c0_2 = arith.constant 0 : index
    %1 = vector.load %arg2[%c0_1, %c0_2] : memref<32x16xbf16, #tpu.memory_space<vmem>>, vector<32x16xbf16>
    %cst = arith.constant dense<0.000000e+00> : vector<16x16xf32>
    %2 = tpu.matmul %0, %1, %cst {dimension_numbers = #tpu.dot_dimension_numbers<[1], [0], [0], [1], [0, 0, 1, 1], [], []>} : vector<16x32xbf16>, vector<32x16xbf16>, vector<16x16xf32> -> vector<16x16xf32>
    %cst_3 = arith.constant dense<0.000000e+00> : vector<16xf32>
    %3 = vector.multi_reduction <add>, %2, %cst_3 [0] : vector<16x16xf32> to vector<16xf32>
    %4 = vector.shape_cast %3 : vector<16xf32> to vector<1x16xf32>
    %cst_4 = arith.constant 1.600000e+01 : f32
    %5 = vector.broadcast %cst_4 : f32 to vector<1x16xf32>
    %6 = arith.divf %4, %5 : vector<1x16xf32>
    %7 = arith.mulf %2, %2 : vector<16x16xf32>
    %cst_5 = arith.constant dense<0.000000e+00> : vector<16xf32>
    %8 = vector.multi_reduction <add>, %7, %cst_5 [0] : vector<16x16xf32> to vector<16xf32>
    %9 = vector.shape_cast %8 : vector<16xf32> to vector<1x16xf32>
    %cst_6 = arith.constant 1.600000e+01 : f32
    %10 = vector.broadcast %cst_6 : f32 to vector<1x16xf32>
    %11 = arith.divf %9, %10 : vector<1x16xf32>
    %12 = arith.mulf %6, %6 : vector<1x16xf32>
    %13 = arith.subf %11, %12 : vector<1x16xf32>
    %cst_7 = arith.constant 0.000000e+00 : f32
    %14 = vector.broadcast %cst_7 : f32 to vector<1x16xf32>
    %15 = arith.maximumf %13, %14 : vector<1x16xf32>
    %c0_8 = arith.constant 0 : index
    %c0_9 = arith.constant 0 : index
    %16 = vector.load %arg3[%c0_8, %c0_9] : memref<1x16xf32, #tpu.memory_space<vmem>>, vector<1x16xf32>
    %cst_10 = arith.constant 9.99999974E-6 : f32
    %17 = vector.broadcast %cst_10 : f32 to vector<1x16xf32>
    %18 = arith.addf %15, %17 : vector<1x16xf32>
    %19 = math.rsqrt %18 : vector<1x16xf32>
    %20 = arith.mulf %16, %19 : vector<1x16xf32>
    %c0_11 = arith.constant 0 : index
    %c0_12 = arith.constant 0 : index
    %21 = vector.load %arg4[%c0_11, %c0_12] : memref<1x16xf32, #tpu.memory_space<vmem>>, vector<1x16xf32>
    %22 = arith.mulf %6, %20 : vector<1x16xf32>
    %23 = arith.subf %21, %22 : vector<1x16xf32>
    %24 = vector.broadcast %20 : vector<1x16xf32> to vector<16x16xf32>
    %25 = arith.mulf %2, %24 : vector<16x16xf32>
    %26 = vector.broadcast %23 : vector<1x16xf32> to vector<16x16xf32>
    %27 = arith.addf %25, %26 : vector<16x16xf32>
    %cst_13 = arith.constant 0.00999999977 : f32
    %28 = vector.broadcast %cst_13 : f32 to vector<16x16xf32>
    %29 = arith.mulf %28, %27 : vector<16x16xf32>
    %30 = arith.maximumf %27, %29 : vector<16x16xf32>
    %31 = arith.truncf %30 : vector<16x16xf32> to vector<16x16xbf16>
    %c0_14 = arith.constant 0 : index
    %c0_15 = arith.constant 0 : index
    %32 = vector.load %arg5[%c0_14, %c0_15] : memref<16x16xbf16, #tpu.memory_space<vmem>>, vector<16x16xbf16>
    %cst_16 = arith.constant dense<0.000000e+00> : vector<16x16xf32>
    %33 = tpu.matmul %31, %32, %cst_16 {dimension_numbers = #tpu.dot_dimension_numbers<[1], [0], [0], [1], [0, 0, 1, 1], [], []>} : vector<16x16xbf16>, vector<16x16xbf16>, vector<16x16xf32> -> vector<16x16xf32>
    %c0_17 = arith.constant 0 : index
    %c0_18 = arith.constant 0 : index
    %34 = vector.load %arg6[%c0_17, %c0_18] : memref<1x16xf32, #tpu.memory_space<vmem>>, vector<1x16xf32>
    %35 = vector.broadcast %34 : vector<1x16xf32> to vector<16x16xf32>
    %36 = arith.addf %33, %35 : vector<16x16xf32>
    %37 = vector.shape_cast %36 : vector<16x16xf32> to vector<2x8x16xf32>
    %c0_19 = arith.constant 0 : index
    %c0_20 = arith.constant 0 : index
    %c0_21 = arith.constant 0 : index
    %38 = vector.load %arg10[%c0_19, %c0_20, %c0_21] : memref<2x8x16xf32, #tpu.memory_space<vmem>>, vector<2x8x16xf32>
    tpu.vector_store %arg10[%c0_19, %c0_20, %c0_21], %37 {strides = array<i32>} : memref<2x8x16xf32, #tpu.memory_space<vmem>>, vector<2x8x16xf32>,
    %39 = vector.extract_strided_slice %37 {offsets = [0, 1, 0], sizes = [2, 7, 16], strides = [1, 1, 1]} : vector<2x8x16xf32> to vector<2x7x16xf32>
    %40 = vector.extract_strided_slice %37 {offsets = [0, 0, 0], sizes = [2, 1, 16], strides = [1, 1, 1]} : vector<2x8x16xf32> to vector<2x1x16xf32>
    %41 = tpu.concatenate %39, %40 in 1 : vector<2x7x16xf32>, vector<2x1x16xf32> -> vector<2x8x16xf32>
    %42 = arith.mulf %37, %41 : vector<2x8x16xf32>
    %cst_22 = arith.constant dense<0.000000e+00> : vector<2x8xf32>
    %43 = vector.multi_reduction <add>, %42, %cst_22 [2] : vector<2x8x16xf32> to vector<2x8xf32>
    %44 = vector.extract_strided_slice %43 {offsets = [0, 0], sizes = [2, 7], strides = [1, 1]} : vector<2x8xf32> to vector<2x7xf32>
    %45 = arith.mulf %37, %37 : vector<2x8x16xf32>
    %cst_23 = arith.constant dense<0.000000e+00> : vector<2x8xf32>
    %46 = vector.multi_reduction <add>, %45, %cst_23 [2] : vector<2x8x16xf32> to vector<2x8xf32>
    %47 = vector.extract_strided_slice %46 {offsets = [0, 0], sizes = [2, 7], strides = [1, 1]} : vector<2x8xf32> to vector<2x7xf32>
    %48 = vector.extract_strided_slice %46 {offsets = [0, 1], sizes = [2, 7], strides = [1, 1]} : vector<2x8xf32> to vector<2x7xf32>
    %c0_i32 = arith.constant 0 : i32
    %c7_i32 = arith.constant 7 : i32
    %49 = arith.addi %c0_i32, %c7_i32 : i32
    %c1_i32 = arith.constant 1 : i32
    scf.for %arg12 = %c0_i32 to %49 step %c1_i32  : i32 {
      %97 = arith.index_cast %arg12 : i32 to index
      %98 = memref.load %arg7[%97] : memref<7xi32, #tpu.memory_space<smem>>
      %c0_46 = arith.constant 0 : index
      %99 = arith.index_cast %98 : i32 to index
      %c0_47 = arith.constant 0 : index
      %100 = vector.load %arg10[%c0_46, %99, %c0_47] : memref<2x8x16xf32, #tpu.memory_space<vmem>>, vector<2x1x16xf32>
      %c0_48 = arith.constant 0 : index
      %101 = arith.index_cast %arg12 : i32 to index
      %c0_49 = arith.constant 0 : index
      %102 = vector.load %arg11[%c0_48, %101, %c0_49] : memref<2x7x16xf32, #tpu.memory_space<vmem>>, vector<2x1x16xf32>
      tpu.vector_store %arg11[%c0_48, %101, %c0_49], %100 {strides = array<i32>} : memref<2x7x16xf32, #tpu.memory_space<vmem>>, vector<2x1x16xf32>,
    }
    %c7_i32_24 = arith.constant 7 : i32
    %50 = vector.extract_strided_slice %37 {offsets = [0, 0, 0], sizes = [2, 7, 16], strides = [1, 1, 1]} : vector<2x8x16xf32> to vector<2x7x16xf32>
    %c0_25 = arith.constant 0 : index
    %c0_26 = arith.constant 0 : index
    %c0_27 = arith.constant 0 : index
    %51 = vector.load %arg11[%c0_25, %c0_26, %c0_27] : memref<2x7x16xf32, #tpu.memory_space<vmem>>, vector<2x7x16xf32>
    %52 = arith.mulf %50, %51 : vector<2x7x16xf32>
    %cst_28 = arith.constant dense<0.000000e+00> : vector<2x7xf32>
    %53 = vector.multi_reduction <add>, %52, %cst_28 [2] : vector<2x7x16xf32> to vector<2x7xf32>
    %54 = arith.mulf %51, %51 : vector<2x7x16xf32>
    %cst_29 = arith.constant dense<0.000000e+00> : vector<2x7xf32>
    %55 = vector.multi_reduction <add>, %54, %cst_29 [2] : vector<2x7x16xf32> to vector<2x7xf32>
    %cst_30 = arith.constant 1.000000e-16 : f32
    %56 = vector.broadcast %cst_30 : f32 to vector<2x7xf32>
    %57 = arith.maximumf %47, %56 : vector<2x7xf32>
    %cst_31 = arith.constant 1.000000e-16 : f32
    %58 = vector.broadcast %cst_31 : f32 to vector<2x7xf32>
    %59 = arith.maximumf %48, %58 : vector<2x7xf32>
    %60 = arith.mulf %57, %59 : vector<2x7xf32>
    %61 = math.rsqrt %60 : vector<2x7xf32>
    %62 = arith.mulf %44, %61 : vector<2x7xf32>
    %cst_32 = arith.constant 1.000000e-16 : f32
    %63 = vector.broadcast %cst_32 : f32 to vector<2x7xf32>
    %64 = arith.maximumf %47, %63 : vector<2x7xf32>
    %cst_33 = arith.constant 1.000000e-16 : f32
    %65 = vector.broadcast %cst_33 : f32 to vector<2x7xf32>
    %66 = arith.maximumf %55, %65 : vector<2x7xf32>
    %67 = arith.mulf %64, %66 : vector<2x7xf32>
    %68 = math.rsqrt %67 : vector<2x7xf32>
    %69 = arith.mulf %53, %68 : vector<2x7xf32>
    %70 = arith.maximumf %62, %69 : vector<2x7xf32>
    %71 = arith.subf %62, %69 : vector<2x7xf32>
    %72 = math.absf %71 : vector<2x7xf32>
    %cst_34 = arith.constant 0.000000e+00 : f32
    %73 = vector.broadcast %cst_34 : f32 to vector<2x7xf32>
    %74 = arith.subf %73, %72 : vector<2x7xf32>
    %75 = math.exp %74 : vector<2x7xf32>
    %cst_35 = arith.constant 1.000000e+00 : f32
    %76 = vector.broadcast %cst_35 : f32 to vector<2x7xf32>
    %77 = arith.addf %76, %75 : vector<2x7xf32>
    %78 = math.log %77 : vector<2x7xf32>
    %79 = arith.addf %70, %78 : vector<2x7xf32>
    %80 = arith.subf %62, %79 : vector<2x7xf32>
    %81 = arith.subf %69, %79 : vector<2x7xf32>
    %cst_36 = arith.constant 0.000000e+00 : f32
    %82 = vector.broadcast %cst_36 : f32 to vector<2x7xf32>
    %83 = arith.subf %82, %80 : vector<2x7xf32>
    %c0_37 = arith.constant 0 : index
    %c0_38 = arith.constant 0 : index
    %84 = vector.load %arg1[%c0_37, %c0_38] : memref<2x7xf32, #tpu.memory_space<vmem>>, vector<2x7xf32>
    %cst_39 = arith.constant 1.000000e+00 : f32
    %85 = vector.broadcast %cst_39 : f32 to vector<2x7xf32>
    %86 = arith.subf %85, %84 : vector<2x7xf32>
    %87 = arith.mulf %83, %86 : vector<2x7xf32>
    %cst_40 = arith.constant 0.000000e+00 : f32
    %88 = vector.broadcast %cst_40 : f32 to vector<2x121xf32>
    %89 = tpu.concatenate %80, %88 in 1 : vector<2x7xf32>, vector<2x121xf32> -> vector<2x128xf32>
    %90 = tpu.concatenate %81, %88 in 1 : vector<2x7xf32>, vector<2x121xf32> -> vector<2x128xf32>
    %91 = tpu.concatenate %87, %88 in 1 : vector<2x7xf32>, vector<2x121xf32> -> vector<2x128xf32>
    %92 = vector.shape_cast %89 : vector<2x128xf32> to vector<1x2x128xf32>
    %93 = vector.shape_cast %90 : vector<2x128xf32> to vector<1x2x128xf32>
    %94 = tpu.concatenate %92, %93 in 0 : vector<1x2x128xf32>, vector<1x2x128xf32> -> vector<2x2x128xf32>
    %c0_41 = arith.constant 0 : index
    %c0_42 = arith.constant 0 : index
    %c0_43 = arith.constant 0 : index
    %95 = vector.load %arg8[%c0_41, %c0_42, %c0_43] : memref<2x2x128xf32, #tpu.memory_space<vmem>>, vector<2x2x128xf32>
    tpu.vector_store %arg8[%c0_41, %c0_42, %c0_43], %94 {strides = array<i32>} : memref<2x2x128xf32, #tpu.memory_space<vmem>>, vector<2x2x128xf32>,
    %c0_44 = arith.constant 0 : index
    %c0_45 = arith.constant 0 : index
    %96 = vector.load %arg9[%c0_44, %c0_45] : memref<2x128xf32, #tpu.memory_space<vmem>>, vector<2x128xf32>
    tpu.vector_store %arg9[%c0_44, %c0_45], %91 {strides = array<i32>} : memref<2x128xf32, #tpu.memory_space<vmem>>, vector<2x128xf32>,
    return
  }
}

</mosaic_0001>

<llo_original>
// kernel: tpu_custom_call.1
$region0: #{tpu_custom_call.1}
  #allocation0 [shape = 'u32[]', space=smem, size = 0x4, offset = 0x4, fixed_abs, tag = 'smem constant byte address 0x4 - core index']
  #allocation1 [shape = 'u32[72,128]{1,0:T(1,128)}', space=vmem, size = 0x9000, scoped, tag = 'internal scratch']
  #allocation2 [shape = 'f32[2,8,16]{2,1,0:T(8,128)}', space=vmem, size = 0x2000, scoped, tag = 'scratch operand']
  #allocation3 [shape = 'f32[2,7,16]{2,1,0:T(8,128)}', space=vmem, size = 0x2000, scoped, tag = 'scratch operand']
  %s0 = inlined_call_operand.vmem [shape: bf16[16,32], index: 0, kind: input, shape index: {}]
  %s1 = inlined_call_operand.vmem [shape: f32[2,7], index: 1, kind: input, shape index: {}]
  %s2 = inlined_call_operand.vmem [shape: bf16[32,16], index: 2, kind: input, shape index: {}]
  %s3 = inlined_call_operand.vmem [shape: f32[1,16], index: 3, kind: input, shape index: {}]
  %s4 = inlined_call_operand.vmem [shape: f32[1,16], index: 4, kind: input, shape index: {}]
  %s5 = inlined_call_operand.vmem [shape: bf16[16,16], index: 5, kind: input, shape index: {}]
  %s6 = inlined_call_operand.vmem [shape: f32[1,16], index: 6, kind: input, shape index: {}]
  %s7 = inlined_call_operand.vmem [shape: s32[7], index: 7, kind: input, shape index: {}]
  %s8 = inlined_call_operand.hbm [shape: f32[2,2,128], index: 8, kind: output, shape index: {0}]
  %s9 = inlined_call_operand.hbm [shape: f32[2,128], index: 9, kind: output, shape index: {1}]
  %10 = xla_tuple %s8, %s9
  %s11 = sld [smem:[#allocation0]]
  $region61: #{tpu_custom_call.1} parent=0
    _
  %s13 = ssub.s32 1, %s11
  %s14 = scalar_select 0, %s13, %s11
  $region1: #{tpu_custom_call.1} parent=0
    #allocation4 [shape = 'u8[512]{0}', space=smem, size = 0x200, scoped, tag = 'input window, operand 7, single buffered']
    #allocation5 [shape = 's32[1]{0}', space=sflag, size = 0x4, scoped, tag = 'scoped memory for tpu_custom_call.1']
    #allocation6 [shape = 's32[1]{0}', space=sflag, size = 0x4, scoped, tag = 'scoped memory for tpu_custom_call.1']
    #allocation7 [shape = 'u8[2048]{0}', space=vmem, size = 0x800, scoped, tag = 'output window, operand 0, single buffered']
    #allocation8 [shape = 'u8[1024]{0}', space=vmem, size = 0x400, scoped, tag = 'output window, operand 1, single buffered']
    #allocation9 [shape = 's32[1]{0}', space=sflag, size = 0x4, scoped, tag = 'scoped memory for tpu_custom_call.1']
    %15 = vsyncpa [#allocation6], 0
    %16 = vsyncpa [#allocation5], 0
    %17 = vsyncpa [#allocation9], 0
    // Predicated region
    $region2: #{tpu_custom_call.1} parent=1 // pred_check
      _
    $region3: #{tpu_custom_call.1} parent=1 // pred_check_branch
      %19 = sbr.rel (0) target = $region5
    $region4: #{tpu_custom_call.1} parent=1 // pred_region
      _
    $region5: #{tpu_custom_call.1} parent=1 // pred_fallthru
      _
    // Predicated region
    $region6: #{tpu_custom_call.1} parent=1 // pred_check
      _
    $region7: #{tpu_custom_call.1} parent=1 // pred_check_branch
      %21 = sbr.rel (0) target = $region9
    $region8: #{tpu_custom_call.1} parent=1 // pred_region
      _
    $region9: #{tpu_custom_call.1} parent=1 // pred_fallthru
      _
    // Predicated region
    $region10: #{tpu_custom_call.1} parent=1 // pred_check
      _
    $region11: #{tpu_custom_call.1} parent=1 // pred_check_branch
      %23 = sbr.rel (0) target = $region13
    $region12: #{tpu_custom_call.1} parent=1 // pred_region
      _
    $region13: #{tpu_custom_call.1} parent=1 // pred_fallthru
      _
    // Predicated region
    $region14: #{tpu_custom_call.1} parent=1 // pred_check
      _
    $region15: #{tpu_custom_call.1} parent=1 // pred_check_branch
      %25 = sbr.rel (0) target = $region17
    $region16: #{tpu_custom_call.1} parent=1 // pred_region
      _
    $region17: #{tpu_custom_call.1} parent=1 // pred_fallthru
      _
    // Predicated region
    $region18: #{tpu_custom_call.1} parent=1 // pred_check
      _
    $region19: #{tpu_custom_call.1} parent=1 // pred_check_branch
      %27 = sbr.rel (0) target = $region21
    $region20: #{tpu_custom_call.1} parent=1 // pred_region
      _
    $region21: #{tpu_custom_call.1} parent=1 // pred_fallthru
      _
    // Predicated region
    $region22: #{tpu_custom_call.1} parent=1 // pred_check
      _
    $region23: #{tpu_custom_call.1} parent=1 // pred_check_branch
      %29 = sbr.rel (0) target = $region25
    $region24: #{tpu_custom_call.1} parent=1 // pred_region
      _
    $region25: #{tpu_custom_call.1} parent=1 // pred_fallthru
      _
    // Predicated region
    $region26: #{tpu_custom_call.1} parent=1 // pred_check
      _
    $region27: #{tpu_custom_call.1} parent=1 // pred_check_branch
      %31 = sbr.rel (0) target = $region29
    $region28: #{tpu_custom_call.1} parent=1 // pred_region
      _
    $region29: #{tpu_custom_call.1} parent=1 // pred_fallthru
      _
    // Predicated region
    $region30: #{tpu_custom_call.1} parent=1 // pred_check
      _
    $region31: #{tpu_custom_call.1} parent=1 // pred_check_branch
      %33 = sbr.rel (0) target = $region33
    $region32: #{tpu_custom_call.1} parent=1 // pred_region
      %35 = vsyncadd [#allocation6], 0
      %s37 = sshll.u32 %s7, 4
      %s38 = int_to_ptr.vmem [resolvable:$true] %s37
      %40 = dma.vmem_to_smem %s38, 16, [#allocation4], [#allocation6]
    $region33: #{tpu_custom_call.1} parent=1 // pred_fallthru
      _
    // Predicated region
    $region34: #{tpu_custom_call.1} parent=1 // pred_check
      _
    $region35: #{tpu_custom_call.1} parent=1 // pred_check_branch
      %42 = sbr.rel (0) target = $region37
    $region36: #{tpu_custom_call.1} parent=1 // pred_region
      %44 = dma.done [#allocation6], 16
    $region37: #{tpu_custom_call.1} parent=1 // pred_fallthru
      _
    %45 = sfence
    %v47 = vld [vmem:[%s0] sm:$0xf]
    %v48 = vld [vmem:[%s0 + $0x4] sm:$0xf]
    %v49 = vld [vmem:[%s2] sm:$0xf]
    %v50 = vld [vmem:[%s2 + $0x4] sm:$0xf]
    %v51 = vld [vmem:[%s2 + $0x8] sm:$0xf]
    %v52 = vld [vmem:[%s2 + $0xc] sm:$0xf]
    %v55 = vunpack.c.l.b16 %v47
    %v56 = vunpack.c.l.b16 %v48
    %v57 = vpack.c.b16 %v56, %v55
    %v62 = vunpack.c.l.b16 %v49
    %v63 = vunpack.c.l.b16 %v50
    %v64 = vunpack.c.l.b16 %v51
    %v65 = vunpack.c.l.b16 %v52
    %v66 = vpack.c.b16 %v63, %v62
    %v67 = vpack.c.b16 %v65, %v64
    %vm70 = vcmask 261120
    %v72 = vsel %vm70, %v57, 0
    %74 = vmatpush.bf16.msra.mxu0 0
    %75 = vmatpush.bf16.msra.mxu0 0
    %76 = vmatpush.bf16.msra.mxu0 0
    %77 = vmatpush.bf16.msra.mxu0 0
    %78 = vmatpush.bf16.msra.mxu0 0
    %79 = vmatpush.bf16.msra.mxu0 0
    %80 = vmatpush.bf16.msra.mxu0 %v67
    %81 = vmatpush.bf16.msra.mxu0 %v66
    %82 = vmatmul.bf16.gmra.mxu0 %v72
    %v83 = vpop.f32.mrf.mxu0
    %v84 = vadd.f32 0.0, %v83
    %v85 = vpop.f32.mrf.mxu0
    %v86 = vadd.f32 0.0, %v85
    %87 = vdwg.mxu0
    %vm88 = vcmask 130048
    %v89 = vsel %vm88, %v84, 0.0
    %v90 = vsel %vm88, %v86, 0.0
    %v91 = vadd.f32 %v89, %v90
    %v92 = vrot.slane %v91, 4
    %v93 = vadd.f32 %v91, %v92
    %v94 = vrot.slane %v93, 2
    %v95 = vadd.f32 %v93, %v94
    %v96 = vrot.slane %v95, 1
    %v97 = vadd.f32 %v95, %v96
    %v98 = vrcp.pop 16.0
    %v99 = vmul.f32 16.0, %v98
    %v100 = vsub.f32 1.0, %v99
    %v101 = vmul.f32 %v98, %v100
    %v102 = vadd.f32 %v98, %v101
    %vm103 = vweird.f32 %v98
    %v104 = vsel %vm103, %v98, %v102
    %v105 = vmul.f32 %v97, %v104
    %v106 = vmul.f32 %v84, %v84
    %v107 = vmul.f32 %v86, %v86
    %v108 = vsel %vm88, %v106, 0.0
    %v109 = vsel %vm88, %v107, 0.0
    %v110 = vadd.f32 %v108, %v109
    %v111 = vrot.slane %v110, 4
    %v112 = vadd.f32 %v110, %v111
    %v113 = vrot.slane %v112, 2
    %v114 = vadd.f32 %v112, %v113
    %v115 = vrot.slane %v114, 1
    %v116 = vadd.f32 %v114, %v115
    %v117 = vmul.f32 %v116, %v104
    %v118 = vmul.f32 %v105, %v105
    %v119 = vsub.f32 %v117, %v118
    %v120 = vmax.f32 %v119, 0.0
    %v121 = vld [vmem:[%s3] sm:$0x1]
    %v122 = vadd.f32 %v120, 1e-05
    %v123 = vrsqrt.pop %v122
    %v124 = vmul.f32 %v123, %v122
    %v125 = vmul.f32 %v124, %v123
    %v126 = vmul.f32 0.5, %v125
    %v127 = vsub.f32 1.5, %v126
    %v128 = vmul.f32 %v123, %v127
    %vm129 = vweird.f32 %v122
    %vm130 = vweird.f32 %v123
    %vm131 = vmor %vm129, %vm130
    %v132 = vsel %vm131, %v123, %v128
    %v133 = vmul.f32 %v121, %v132
    %v134 = vld [vmem:[%s4] sm:$0x1]
    %v135 = vmul.f32 %v105, %v133
    %v136 = vsub.f32 %v134, %v135
    %v138 = vperm.slane %v133, 0
    %v140 = vmul.f32 %v84, %v138
    %v141 = vmul.f32 %v86, %v138
    %v143 = vperm.slane %v136, 0
    %v145 = vadd.f32 %v140, %v143
    %v146 = vadd.f32 %v141, %v143
    %v147 = vmul.f32 %v145, 0.01
    %v148 = vmul.f32 %v146, 0.01
    %v149 = vmax.f32 %v145, %v147
    %v150 = vmax.f32 %v146, %v148
    %v151 = vpack.c.bf16 %v150, %v149
    %v152 = vld [vmem:[%s5] sm:$0xf]
    %v153 = vld [vmem:[%s5 + $0x4] sm:$0xf]
    %v154 = vld [vmem:[%s6] sm:$0x1]
    %v156 = vperm.slane %v154, 0
    %v160 = vunpack.c.l.b16 %v152
    %v161 = vunpack.c.l.b16 %v153
    %v162 = vpack.c.b16 %v161, %v160
    %v165 = vsel %vm88, %v151, 0
    %167 = vmatpush.bf16.msra.mxu0 0
    %168 = vmatpush.bf16.msra.mxu0 0
    %169 = vmatpush.bf16.msra.mxu0 0
    %170 = vmatpush.bf16.msra.mxu0 0
    %171 = vmatpush.bf16.msra.mxu0 0
    %172 = vmatpush.bf16.msra.mxu0 0
    %173 = vmatpush.bf16.msra.mxu0 0
    %174 = vmatpush.bf16.msra.mxu0 %v162
    %175 = vmatmul.bf16.gmra.mxu0 %v165
    %v176 = vpop.f32.mrf.mxu0
    %v177 = vadd.f32 %v156, %v176
    %v178 = vpop.f32.mrf.mxu0
    %v179 = vadd.f32 %v156, %v178
    %180 = vdwg.mxu0
    %181 = vst.msk [vmem:[#allocation2] sm:$0xff] %vm88, %v177
    %182 = vst.msk [vmem:[#allocation2 + $0x8] sm:$0xff] %vm88, %v179
    %v185 = vrot.slane %v177, 1
    %v186 = vrot.slane %v179, 1
    %vm189 = vcmask 1046528
    %v190 = vsel %vm189, %v185, %v185
    %v191 = vsel %vm189, %v186, %v186
    %v192 = vmul.f32 %v177, %v190
    %v193 = vmul.f32 %v179, %v191
    %v194 = vsel %vm88, %v192, 0.0
    %195 = vadd.xlane.f32.xlu0 %v194
    %v196 = vpop.xlane.xlu0 %195
    %v197 = vsel %vm88, %v193, 0.0
    %198 = vadd.xlane.f32.xlu0 %v197
    %v199 = vpop.xlane.xlu0 %198
    %v200 = vmul.f32 %v177, %v177
    %v201 = vmul.f32 %v179, %v179
    %v202 = vsel %vm88, %v200, 0.0
    %203 = vadd.xlane.f32.xlu0 %v202
    %v204 = vpop.xlane.xlu0 %203
    %v205 = vsel %vm88, %v201, 0.0
    %206 = vadd.xlane.f32.xlu0 %v205
    %v207 = vpop.xlane.xlu0 %206
    loop: start=0, step=1, limit=7
    $region38: #{tpu_custom_call.1} parent=1 // loop_pre_header
      _
    $region39: #{tpu_custom_call.1} parent=1 // loop_header
      %s209 = sphi 0, %s213
      %p210 = scmp.ge.s32.totalorder %s209, 7
    $region40: #{tpu_custom_call.1} parent=1 // loop_header_branch
      %212 = sbr.rel (%p210) target = $region44
    $region41: #{tpu_custom_call.1} parent=1 // loop_body
      %s214 = sld [smem:[#allocation4 + %s209]]
      %s215 = scalar_lea.vmem [#allocation2], %s214
      %v216 = vld [vmem:[%s215] sm:$0x1]
      %v217 = vld [vmem:[%s215 + $0x8] sm:$0x1]
      %s218 = scalar_lea.vmem [#allocation3], %s209
      %vm219 = vcmask 122880
      %220 = vst.msk [vmem:[%s218] sm:$0x1] %vm219, %v216
      %221 = vst.msk [vmem:[%s218 + $0x8] sm:$0x1] %vm219, %v217
    $region42: #{tpu_custom_call.1} parent=1 // loop_footer
      %s213 = sadd.s32 1, %s209
    $region43: #{tpu_custom_call.1} parent=1 // loop_footer_branch
      %208 = sbr.rel target = $region39
    $region44: #{tpu_custom_call.1} parent=1 // loop_exit
      _
    %v222 = vld [vmem:[#allocation3] sm:$0x7f]
    %v223 = vld [vmem:[#allocation3 + $0x8] sm:$0x7f]
    %v224 = vmul.f32 %v177, %v222
    %v225 = vmul.f32 %v179, %v223
    %vm226 = vcmask 129024
    %v227 = vsel %vm226, %v224, 0.0
    %228 = vadd.xlane.f32.xlu0 %v227
    %v229 = vpop.xlane.xlu0 %228
    %v230 = vsel %vm226, %v225, 0.0
    %231 = vadd.xlane.f32.xlu0 %v230
    %v232 = vpop.xlane.xlu0 %231
    %v233 = vmul.f32 %v222, %v222
    %v234 = vmul.f32 %v223, %v223
    %v235 = vsel %vm226, %v233, 0.0
    %236 = vadd.xlane.f32.xlu0 %v235
    %v237 = vpop.xlane.xlu0 %236
    %v238 = vsel %vm226, %v234, 0.0
    %239 = vadd.xlane.f32.xlu0 %v238
    %v240 = vpop.xlane.xlu0 %239
    %v241 = vmax.f32 %v204, 1e-16
    %v242 = vmax.f32 %v207, 1e-16
    %v245 = vrot.slane %v241, 1
    %v246 = vrot.slane %v242, 1
    %v249 = vmul.f32 %v241, %v245
    %v250 = vmul.f32 %v242, %v246
    %v251 = vrsqrt.pop %v249
    %v252 = vmul.f32 %v251, %v249
    %v253 = vmul.f32 %v252, %v251
    %v254 = vmul.f32 0.5, %v253
    %v255 = vsub.f32 1.5, %v254
    %v256 = vmul.f32 %v251, %v255
    %vm257 = vweird.f32 %v249
    %vm258 = vweird.f32 %v251
    %vm259 = vmor %vm257, %vm258
    %v260 = vsel %vm259, %v251, %v256
    %v261 = vrsqrt.pop %v250
    %v262 = vmul.f32 %v261, %v250
    %v263 = vmul.f32 %v262, %v261
    %v264 = vmul.f32 0.5, %v263
    %v265 = vsub.f32 1.5, %v264
    %v266 = vmul.f32 %v261, %v265
    %vm267 = vweird.f32 %v250
    %vm268 = vweird.f32 %v261
    %vm269 = vmor %vm267, %vm268
    %v270 = vsel %vm269, %v261, %v266
    %v271 = vmul.f32 %v196, %v260
    %v272 = vmul.f32 %v199, %v270
    %v273 = vmax.f32 %v237, 1e-16
    %v274 = vmax.f32 %v240, 1e-16
    %v275 = vmul.f32 %v241, %v273
    %v276 = vmul.f32 %v242, %v274
    %v277 = vrsqrt.pop %v275
    %v278 = vmul.f32 %v277, %v275
    %v279 = vmul.f32 %v278, %v277
    %v280 = vmul.f32 0.5, %v279
    %v281 = vsub.f32 1.5, %v280
    %v282 = vmul.f32 %v277, %v281
    %vm283 = vweird.f32 %v275
    %vm284 = vweird.f32 %v277
    %vm285 = vmor %vm283, %vm284
    %v286 = vsel %vm285, %v277, %v282
    %v287 = vrsqrt.pop %v276
    %v288 = vmul.f32 %v287, %v276
    %v289 = vmul.f32 %v288, %v287
    %v290 = vmul.f32 0.5, %v289
    %v291 = vsub.f32 1.5, %v290
    %v292 = vmul.f32 %v287, %v291
    %vm293 = vweird.f32 %v276
    %vm294 = vweird.f32 %v287
    %vm295 = vmor %vm293, %vm294
    %v296 = vsel %vm295, %v287, %v292
    %v297 = vmul.f32 %v229, %v286
    %v298 = vmul.f32 %v232, %v296
    %v299 = vmax.f32 %v271, %v297
    %v300 = vmax.f32 %v272, %v298
    %v301 = vsub.f32 %v271, %v297
    %v302 = vsub.f32 %v272, %v298
    %v303 = vand.u32 2147483647, %v301
    %v304 = vand.u32 2147483647, %v302
    %v305 = vsub.f32 0.0, %v303
    %v306 = vsub.f32 0.0, %v304
    %v307 = vmul.f32 %v305, 1.442695
    %v308 = vpow.pop %v307
    %v309 = vmul.f32 %v306, 1.442695
    %v310 = vpow.pop %v309
    %v311 = vadd.f32 %v308, 1.0
    %v312 = vadd.f32 %v310, 1.0
    %v313 = vlog2.pop %v311
    %v314 = vmul.f32 %v313, 0.6931472
    %v315 = vlog2.pop %v312
    %v316 = vmul.f32 %v315, 0.6931472
    %v317 = vadd.f32 %v299, %v314
    %v318 = vadd.f32 %v300, %v316
    %v319 = vsub.f32 %v271, %v317
    %v320 = vsub.f32 %v272, %v318
    %v321 = vsub.f32 %v297, %v317
    %v322 = vsub.f32 %v298, %v318
    %v323 = vsub.f32 0.0, %v319
    %v324 = vsub.f32 0.0, %v320
    %v325 = vld [vmem:[%s1] sm:$0x3]
    %v326 = vsub.f32 1.0, %v325
    %v328 = vperm.slane %v326, 0
    %v329 = vlaneseq
    %v330 = vshrl.u32 %v329, 7
    %332 = vset.pattern.permute.xlu0 %v330
    %333 = vperm.xlu0 %332, %v328
    %v334 = vpop.permute.xlu0 %333
    %v335 = vperm.slane %v326, 1
    %v336 = vlaneseq
    %v337 = vshrl.u32 %v336, 7
    %339 = vset.pattern.permute.xlu0 %v337
    %340 = vperm.xlu0 %339, %v335
    %v341 = vpop.permute.xlu0 %340
    %v344 = vmul.f32 %v323, %v334
    %v345 = vmul.f32 %v324, %v341
    %348 = vset.pattern.permute.xlu0 0
    %349 = vperm.xlu0 %348, %v319
    %v350 = vpop.permute.xlu0 %349
    %351 = vset.pattern.permute.xlu0 0
    %352 = vperm.xlu0 %351, %v320
    %v353 = vpop.permute.xlu0 %352
    %v354 = vlaneseq
    %v355 = vand.u32 %v354, 127
    %v356 = vperm.slane %v350, %v355
    %v357 = vperm.slane %v353, %v355
    %vm358 = vcmask 1041409
    %v359 = vsel %vm358, %v357, %v356
    %vm361 = vcmask 56320
    %v362 = vsel %vm361, %v359, 0.0
    %365 = vset.pattern.permute.xlu0 0
    %366 = vperm.xlu0 %365, %v321
    %v367 = vpop.permute.xlu0 %366
    %368 = vset.pattern.permute.xlu0 0
    %369 = vperm.xlu0 %368, %v322
    %v370 = vpop.permute.xlu0 %369
    %v371 = vperm.slane %v367, %v355
    %v372 = vperm.slane %v370, %v355
    %v373 = vsel %vm358, %v372, %v371
    %v375 = vsel %vm361, %v373, 0.0
    %378 = vset.pattern.permute.xlu0 0
    %379 = vperm.xlu0 %378, %v344
    %v380 = vpop.permute.xlu0 %379
    %381 = vset.pattern.permute.xlu0 0
    %382 = vperm.xlu0 %381, %v345
    %v383 = vpop.permute.xlu0 %382
    %v384 = vperm.slane %v380, %v355
    %v385 = vperm.slane %v383, %v355
    %v386 = vsel %vm358, %v385, %v384
    %v388 = vsel %vm361, %v386, 0.0
    %389 = vst [vmem:[#allocation7] sm:$0x3] %v362
    %390 = vst [vmem:[#allocation7 + $0x2] sm:$0x3] %v375
    %391 = vst [vmem:[#allocation8] sm:$0x3] %v388
    // Predicated region
    $region45: #{tpu_custom_call.1} parent=1 // pred_check
      _
    $region46: #{tpu_custom_call.1} parent=1 // pred_check_branch
      %393 = sbr.rel (0) target = $region48
    $region47: #{tpu_custom_call.1} parent=1 // pred_region
      %395 = vsyncadd [#allocation5], 0
      %s396 = sshll.u32 [#allocation7], 4
      %s397 = int_to_ptr.vmem [resolvable:$true] %s396
      %s398 = sshll.u32 %s8, 4
      %s399 = int_to_ptr.hbm [resolvable:$true] %s398
      %404 = dma.vmem_to_hbm [thread:$0]  %s397, 64, %s399, [#allocation5], 32, 32, 2
    $region48: #{tpu_custom_call.1} parent=1 // pred_fallthru
      _
    // Predicated region
    $region49: #{tpu_custom_call.1} parent=1 // pred_check
      _
    $region50: #{tpu_custom_call.1} parent=1 // pred_check_branch
      %406 = sbr.rel (0) target = $region52
    $region51: #{tpu_custom_call.1} parent=1 // pred_region
      %408 = vsyncadd [#allocation9], 0
      %s410 = sshll.u32 [#allocation8], 4
      %s411 = int_to_ptr.vmem [resolvable:$true] %s410
      %s412 = sshll.u32 %s9, 4
      %s413 = int_to_ptr.hbm [resolvable:$true] %s412
      %415 = dma.vmem_to_hbm [thread:$0]  %s411, 32, %s413, [#allocation9]
    $region52: #{tpu_custom_call.1} parent=1 // pred_fallthru
      _
    // Predicated region
    $region53: #{tpu_custom_call.1} parent=1 // pred_check
      _
    $region54: #{tpu_custom_call.1} parent=1 // pred_check_branch
      %417 = sbr.rel (0) target = $region56
    $region55: #{tpu_custom_call.1} parent=1 // pred_region
      %419 = dma.done [#allocation5], 64
    $region56: #{tpu_custom_call.1} parent=1 // pred_fallthru
      _
    // Predicated region
    $region57: #{tpu_custom_call.1} parent=1 // pred_check
      _
    $region58: #{tpu_custom_call.1} parent=1 // pred_check_branch
      %421 = sbr.rel (0) target = $region60
    $region59: #{tpu_custom_call.1} parent=1 // pred_region
      %423 = dma.done [#allocation9], 32
    $region60: #{tpu_custom_call.1} parent=1 // pred_fallthru
      _
    %424 = vsyncpa [#allocation5], 1
    %425 = vsyncpa [#allocation9], 1
    %426 = vsyncpa [#allocation6], 1

</llo_original>
